<compile_context>
chip_gen: v7x
topology: tpu7x:2x2x1
jax: 0.10.0
libtpu: 0.0.40
codegen_flags: <defaults>
</compile_context>

<pallas_src>
import functools

import jax
import jax.numpy as jnp
from jax.experimental import pallas as pl
from jax.experimental.pallas import tpu as pltpu


def _dcce_kernel(logits_ref, labels_ref, tgt_ref, num_ref, den_ref, *, num_pixels):
    """One pixel tile: emit per-pixel weighted NLL (num) and class weight (den)."""
    i = pl.program_id(0)
    c, tp = logits_ref.shape

    logits = logits_ref[...].astype(jnp.float32)       # (C, TP)
    labels = labels_ref[...]                           # (1, TP) int32
    tgt = tgt_ref[...]                                 # (1, TP) int32

    # Pixel validity for the (possibly partial) last tile; jnp.where keeps any
    # garbage in the out-of-bounds region from propagating (NaN-safe).
    lane = jax.lax.broadcasted_iota(jnp.int32, (1, tp), 1)
    pix_valid = (i * tp + lane) < num_pixels           # (1, TP) bool

    # Binary don't-care mask, broadcast over the class (sublane) axis.
    mask = jnp.where(labels > 0, 1.0, 0.0)             # (1, TP) f32
    masked = jnp.where(pix_valid, logits * mask, 0.0)  # (C, TP) f32

    # log-sum-exp over classes (sublane reduction).
    mx = jnp.max(masked, axis=0, keepdims=True)                              # (1, TP)
    lse = mx + jnp.log(jnp.sum(jnp.exp(masked - mx), axis=0, keepdims=True))

    # Target logit via one-hot select along the class axis.
    cls = jax.lax.broadcasted_iota(jnp.int32, (c, tp), 0)
    tgt_logit = jnp.sum(jnp.where(cls == tgt, masked, 0.0), axis=0, keepdims=True)

    # CrossEntropyLoss class weights are w[0]=0.5, w[k>0]=1.0 -> a simple where.
    wt = jnp.where(tgt == 0, 0.5, 1.0)
    wt = jnp.where(pix_valid, wt, 0.0)                 # (1, TP)

    num_ref[...] = wt * (lse - tgt_logit)
    den_ref[...] = wt


def dont_care_crossentropy(x_output, y_labels, y1, *, tile_p=2048):
    """x_output: (1, C, H, W) float logits; y_labels: (1, 1, H, W) int; y1: (H, W) int."""
    n, c, h, w = x_output.shape
    assert n == 1, "module semantics only well-defined for batch size 1"
    p = h * w

    # Free, contiguous reshapes only -- no transpose, no class padding.
    logits = x_output.reshape(c, p)                    # (C, P), native layout
    labels = y_labels.reshape(1, p).astype(jnp.int32)  # raw ints; mask made in-kernel
    tgt = y1.reshape(1, p).astype(jnp.int32)

    # Pixel tile: the whole image if it fits (block == full dim is always legal),
    # otherwise tile_p (multiple of 128) with a validity-masked partial last tile.
    assert tile_p % 128 == 0
    tp = p if p <= tile_p else tile_p
    grid = pl.cdiv(p, tp)

    kernel = functools.partial(_dcce_kernel, num_pixels=p)
    num_row, den_row = pl.pallas_call(
        kernel,
        out_shape=(jax.ShapeDtypeStruct((1, p), jnp.float32),
                   jax.ShapeDtypeStruct((1, p), jnp.float32)),
        grid_spec=pltpu.PrefetchScalarGridSpec(
            num_scalar_prefetch=0,
            grid=(grid,),
            in_specs=[
                pl.BlockSpec((c, tp), lambda i: (0, i)),   # logits (C on sublanes)
                pl.BlockSpec((1, tp), lambda i: (0, i)),   # raw labels (lane-dense)
                pl.BlockSpec((1, tp), lambda i: (0, i)),   # targets (lane-dense)
            ],
            out_specs=[pl.BlockSpec((1, tp), lambda i: (0, i)),
                       pl.BlockSpec((1, tp), lambda i: (0, i))],
        ),
        compiler_params=pltpu.CompilerParams(
            dimension_semantics=("parallel",)),   # v7x: both TCs split the pixel range
    )(logits, labels, tgt)

    # Tiny final reduction + divide in plain JAX (weighted-mean CE).
    return jnp.sum(num_row) / jnp.sum(den_row)


def _reference_loss(x_output, y_labels, y1):
    """Pure-JAX reproduction of the PyTorch forward for verification."""
    c = x_output.shape[1]
    mask = (y_labels > 0).astype(jnp.float32)                   # (1,1,H,W)
    masked = x_output * mask                                    # (1,C,H,W)
    logits = jnp.transpose(masked[0].reshape(c, -1), (1, 0))    # (P, C)
    t = y1.reshape(-1)
    w = jnp.ones((c,), jnp.float32).at[0].set(0.5)
    logp = jax.nn.log_softmax(logits, axis=-1)
    nll = -logp[jnp.arange(t.shape[0]), t]
    wt = w[t]
    return jnp.sum(wt * nll) / jnp.sum(wt)


if __name__ == "__main__":
    key = jax.random.PRNGKey(0)

    def run_case(c, h, w):
        k1, k2, k3 = jax.random.split(jax.random.fold_in(key, c * h * w), 3)
        x_output = jax.random.normal(k1, (1, c, h, w), dtype=jnp.float32)
        y_labels = jax.random.randint(k2, (1, 1, h, w), 0, c, dtype=jnp.int32)
        y1 = jax.random.randint(k3, (h, w), 0, c, dtype=jnp.int32)
        loss = jax.block_until_ready(dont_care_crossentropy(x_output, y_labels, y1))
        ref = _reference_loss(x_output, y_labels, y1)
        assert jnp.allclose(loss, ref, rtol=1e-4, atol=1e-4), (c, h, w, loss, ref)

    run_case(49, 16, 16)   # criterion1 path (C=49), single exact tile
    run_case(49, 48, 48)   # p=2304 > 2048: exercises the partial-tile validity mask
    run_case(3, 16, 16)    # criterion path (C=3)

    print("KERNEL_OK")
</pallas_src>

<mosaic_0001>
module attributes {stable_mosaic.version = 11 : i64} {
  func.func @_dcce_kernel(%arg0: i32, %arg1: memref<49x256xf32, #tpu.memory_space<vmem>>, %arg2: memref<1x256xi32, #tpu.memory_space<vmem>>, %arg3: memref<1x256xi32, #tpu.memory_space<vmem>>, %arg4: memref<1x256xf32, #tpu.memory_space<vmem>>, %arg5: memref<1x256xf32, #tpu.memory_space<vmem>>) attributes {dimension_semantics = [#tpu.dimension_semantics<parallel>], iteration_bounds = array<i64: 1>, scalar_prefetch = 0 : i64, scratch_operands = 0 : i64, tpu.core_type = #tpu.core_type<tc>, window_params = [{transform_indices = @transform_0, window_bounds = array<i64: 49, 256>}, {transform_indices = @transform_1, window_bounds = array<i64: 1, 256>}, {transform_indices = @transform_2, window_bounds = array<i64: 1, 256>}, {transform_indices = @transform_3, window_bounds = array<i64: 1, 256>}, {transform_indices = @transform_4, window_bounds = array<i64: 1, 256>}]} {
    %c0 = arith.constant 0 : index
    %c0_0 = arith.constant 0 : index
    %0 = vector.load %arg1[%c0, %c0_0] : memref<49x256xf32, #tpu.memory_space<vmem>>, vector<49x256xf32>
    %c0_1 = arith.constant 0 : index
    %c0_2 = arith.constant 0 : index
    %1 = vector.load %arg2[%c0_1, %c0_2] : memref<1x256xi32, #tpu.memory_space<vmem>>, vector<1x256xi32>
    %c0_3 = arith.constant 0 : index
    %c0_4 = arith.constant 0 : index
    %2 = vector.load %arg3[%c0_3, %c0_4] : memref<1x256xi32, #tpu.memory_space<vmem>>, vector<1x256xi32>
    %3 = tpu.iota {dimensions = array<i32: 1>} : vector<1x256xi32>
    %c256_i32 = arith.constant 256 : i32
    %4 = arith.muli %arg0, %c256_i32 : i32
    %5 = vector.broadcast %4 : i32 to vector<1x256xi32>
    %6 = arith.addi %5, %3 : vector<1x256xi32>
    %c256_i32_5 = arith.constant 256 : i32
    %7 = vector.broadcast %c256_i32_5 : i32 to vector<1x256xi32>
    %8 = arith.cmpi slt, %6, %7 : vector<1x256xi32>
    %c0_i32 = arith.constant 0 : i32
    %9 = vector.broadcast %c0_i32 : i32 to vector<1x256xi32>
    %10 = arith.cmpi sgt, %1, %9 : vector<1x256xi32>
    %cst = arith.constant 1.000000e+00 : f32
    %cst_6 = arith.constant 0.000000e+00 : f32
    %11 = vector.broadcast %cst : f32 to vector<1x256xf32>
    %12 = vector.broadcast %cst_6 : f32 to vector<1x256xf32>
    %13 = arith.select %10, %11, %12 : vector<1x256xi1>, vector<1x256xf32>
    %14 = vector.broadcast %13 : vector<1x256xf32> to vector<49x256xf32>
    %15 = arith.mulf %0, %14 : vector<49x256xf32>
    %cst_7 = arith.constant 0.000000e+00 : f32
    %16 = vector.shape_cast %8 : vector<1x256xi1> to vector<1x256xi1>
    %17 = vector.broadcast %16 : vector<1x256xi1> to vector<49x256xi1>
    %18 = vector.broadcast %cst_7 : f32 to vector<49x256xf32>
    %19 = arith.select %17, %15, %18 : vector<49x256xi1>, vector<49x256xf32>
    %cst_8 = arith.constant dense<0xFF800000> : vector<256xf32>
    %20 = vector.multi_reduction <maximumf>, %19, %cst_8 [0] : vector<49x256xf32> to vector<256xf32>
    %21 = vector.shape_cast %20 : vector<256xf32> to vector<1x256xf32>
    %22 = vector.broadcast %21 : vector<1x256xf32> to vector<49x256xf32>
    %23 = arith.subf %19, %22 : vector<49x256xf32>
    %24 = math.exp %23 : vector<49x256xf32>
    %cst_9 = arith.constant dense<0.000000e+00> : vector<256xf32>
    %25 = vector.multi_reduction <add>, %24, %cst_9 [0] : vector<49x256xf32> to vector<256xf32>
    %26 = vector.shape_cast %25 : vector<256xf32> to vector<1x256xf32>
    %27 = math.log %26 : vector<1x256xf32>
    %28 = arith.addf %21, %27 : vector<1x256xf32>
    %29 = tpu.iota {dimensions = array<i32: 0>} : vector<49x256xi32>
    %30 = vector.broadcast %2 : vector<1x256xi32> to vector<49x256xi32>
    %31 = arith.cmpi eq, %29, %30 : vector<49x256xi32>
    %cst_10 = arith.constant 0.000000e+00 : f32
    %32 = vector.broadcast %cst_10 : f32 to vector<49x256xf32>
    %33 = arith.select %31, %19, %32 : vector<49x256xi1>, vector<49x256xf32>
    %cst_11 = arith.constant dense<0.000000e+00> : vector<256xf32>
    %34 = vector.multi_reduction <add>, %33, %cst_11 [0] : vector<49x256xf32> to vector<256xf32>
    %35 = vector.shape_cast %34 : vector<256xf32> to vector<1x256xf32>
    %c0_i32_12 = arith.constant 0 : i32
    %36 = vector.broadcast %c0_i32_12 : i32 to vector<1x256xi32>
    %37 = arith.cmpi eq, %2, %36 : vector<1x256xi32>
    %cst_13 = arith.constant 5.000000e-01 : f32
    %cst_14 = arith.constant 1.000000e+00 : f32
    %38 = vector.broadcast %cst_13 : f32 to vector<1x256xf32>
    %39 = vector.broadcast %cst_14 : f32 to vector<1x256xf32>
    %40 = arith.select %37, %38, %39 : vector<1x256xi1>, vector<1x256xf32>
    %cst_15 = arith.constant 0.000000e+00 : f32
    %41 = vector.broadcast %cst_15 : f32 to vector<1x256xf32>
    %42 = arith.select %8, %40, %41 : vector<1x256xi1>, vector<1x256xf32>
    %43 = arith.subf %28, %35 : vector<1x256xf32>
    %44 = arith.mulf %42, %43 : vector<1x256xf32>
    %c0_16 = arith.constant 0 : index
    %c0_17 = arith.constant 0 : index
    %45 = vector.load %arg4[%c0_16, %c0_17] : memref<1x256xf32, #tpu.memory_space<vmem>>, vector<1x256xf32>
    tpu.vector_store %arg4[%c0_16, %c0_17], %44 {strides = array<i32>} : memref<1x256xf32, #tpu.memory_space<vmem>>, vector<1x256xf32>,
    %c0_18 = arith.constant 0 : index
    %c0_19 = arith.constant 0 : index
    %46 = vector.load %arg5[%c0_18, %c0_19] : memref<1x256xf32, #tpu.memory_space<vmem>>, vector<1x256xf32>
    tpu.vector_store %arg5[%c0_18, %c0_19], %42 {strides = array<i32>} : memref<1x256xf32, #tpu.memory_space<vmem>>, vector<1x256xf32>,
    return
  }
  func.func @transform_0(%arg0: i32) -> (i32, i32) {
    %c0_i32 = arith.constant 0 : i32
    %c0_i32_0 = arith.constant 0 : i32
    return %c0_i32, %arg0 : i32, i32
  }
  func.func @transform_1(%arg0: i32) -> (i32, i32) {
    %c0_i32 = arith.constant 0 : i32
    %c0_i32_0 = arith.constant 0 : i32
    return %c0_i32, %arg0 : i32, i32
  }
  func.func @transform_2(%arg0: i32) -> (i32, i32) {
    %c0_i32 = arith.constant 0 : i32
    %c0_i32_0 = arith.constant 0 : i32
    return %c0_i32, %arg0 : i32, i32
  }
  func.func @transform_3(%arg0: i32) -> (i32, i32) {
    %c0_i32 = arith.constant 0 : i32
    %c0_i32_0 = arith.constant 0 : i32
    return %c0_i32, %arg0 : i32, i32
  }
  func.func @transform_4(%arg0: i32) -> (i32, i32) {
    %c0_i32 = arith.constant 0 : i32
    %c0_i32_0 = arith.constant 0 : i32
    return %c0_i32, %arg0 : i32, i32
  }
}

</mosaic_0001>

<llo_original>
// kernel: tpu_custom_call.1
$region0: #{tpu_custom_call.1}
  #allocation0 [shape = 'u32[]', space=smem, size = 0x4, offset = 0x4, fixed_abs, tag = 'smem constant byte address 0x4 - core index']
  #allocation1 [shape = 'u32[144,128]{1,0:T(1,128)}', space=vmem, size = 0x12000, scoped, tag = 'internal scratch']
  %s0 = inlined_call_operand.hbm [shape: f32[49,256], index: 0, kind: input, shape index: {}]
  %s1 = inlined_call_operand.vmem [shape: s32[1,256], index: 1, kind: input, shape index: {}]
  %s2 = inlined_call_operand.vmem [shape: s32[1,256], index: 2, kind: input, shape index: {}]
  %s3 = inlined_call_operand.hbm [shape: f32[1,256], index: 3, kind: output, shape index: {0}]
  %s4 = inlined_call_operand.hbm [shape: f32[1,256], index: 4, kind: output, shape index: {1}]
  %5 = xla_tuple %s3, %s4
  %s6 = sld [smem:[#allocation0]]
  $region34: #{tpu_custom_call.1} parent=0
    _
  %s8 = ssub.s32 1, %s6
  %s9 = scalar_select 0, %s8, %s6
  $region1: #{tpu_custom_call.1} parent=0
    #allocation2 [shape = 'u8[57344]{0}', space=vmem, size = 0xe000, scoped, tag = 'input window, operand 0, single buffered']
    #allocation3 [shape = 's32[1]{0}', space=sflag, size = 0x4, scoped, tag = 'scoped memory for tpu_custom_call.1']
    #allocation4 [shape = 's32[1]{0}', space=sflag, size = 0x4, scoped, tag = 'scoped memory for tpu_custom_call.1']
    #allocation5 [shape = 'u8[1024]{0}', space=vmem, size = 0x400, scoped, tag = 'output window, operand 0, single buffered']
    #allocation6 [shape = 'u8[1024]{0}', space=vmem, size = 0x400, scoped, tag = 'output window, operand 1, single buffered']
    #allocation7 [shape = 's32[1]{0}', space=sflag, size = 0x4, scoped, tag = 'scoped memory for tpu_custom_call.1']
    %10 = vsyncpa [#allocation3], 0
    %11 = vsyncpa [#allocation4], 0
    %12 = vsyncpa [#allocation7], 0
    // Predicated region
    $region2: #{tpu_custom_call.1} parent=1 // pred_check
      _
    $region3: #{tpu_custom_call.1} parent=1 // pred_check_branch
      %14 = sbr.rel (0) target = $region5
    $region4: #{tpu_custom_call.1} parent=1 // pred_region
      %s16 = ssub.s32 1792, 1792
      %17 = vsyncadd [#allocation3], %s16
      %s18 = sshll.u32 [#allocation2], 4
      %s19 = int_to_ptr.vmem [resolvable:$true] %s18
      %24 = dma.hbm_to_vmem [thread:$0]  %s0, 1792, %s19, [#allocation3], 256, 256, 16
    $region5: #{tpu_custom_call.1} parent=1 // pred_fallthru
      _
    // Predicated region
    $region6: #{tpu_custom_call.1} parent=1 // pred_check
      _
    $region7: #{tpu_custom_call.1} parent=1 // pred_check_branch
      %26 = sbr.rel (0) target = $region9
    $region8: #{tpu_custom_call.1} parent=1 // pred_region
      _
    $region9: #{tpu_custom_call.1} parent=1 // pred_fallthru
      _
    // Predicated region
    $region10: #{tpu_custom_call.1} parent=1 // pred_check
      _
    $region11: #{tpu_custom_call.1} parent=1 // pred_check_branch
      %28 = sbr.rel (0) target = $region13
    $region12: #{tpu_custom_call.1} parent=1 // pred_region
      _
    $region13: #{tpu_custom_call.1} parent=1 // pred_fallthru
      _
    // Predicated region
    $region14: #{tpu_custom_call.1} parent=1 // pred_check
      _
    $region15: #{tpu_custom_call.1} parent=1 // pred_check_branch
      %30 = sbr.rel (0) target = $region17
    $region16: #{tpu_custom_call.1} parent=1 // pred_region
      %31 = dma.done [#allocation3], 1792
    $region17: #{tpu_custom_call.1} parent=1 // pred_fallthru
      _
    %v32 = vld [vmem:[#allocation2] sm:$0xff]
    %v33 = vld [vmem:[#allocation2 + $0x8] sm:$0xff]
    %v34 = vld [vmem:[#allocation2 + $0x10] sm:$0xff]
    %v35 = vld [vmem:[#allocation2 + $0x18] sm:$0xff]
    %v36 = vld [vmem:[#allocation2 + $0x20] sm:$0xff]
    %v37 = vld [vmem:[#allocation2 + $0x28] sm:$0xff]
    %v38 = vld [vmem:[#allocation2 + $0x30] sm:$0xff]
    %v39 = vld [vmem:[#allocation2 + $0x38] sm:$0xff]
    %v40 = vld [vmem:[#allocation2 + $0x40] sm:$0xff]
    %v41 = vld [vmem:[#allocation2 + $0x48] sm:$0xff]
    %v42 = vld [vmem:[#allocation2 + $0x50] sm:$0xff]
    %v43 = vld [vmem:[#allocation2 + $0x58] sm:$0xff]
    %v44 = vld [vmem:[#allocation2 + $0x60] sm:$0x1]
    %v45 = vld [vmem:[#allocation2 + $0x68] sm:$0x1]
    %v46 = vld [vmem:[%s1] sm:$0x3]
    %v47 = vld [vmem:[%s2] sm:$0x3]
    %v48 = vlaneseq
    %v49 = vand.u32 %v48, 127
    %v50 = vadd.s32 %v49, 128
    %s51 = smul.u32 0, 256
    %v52 = vstv %s51
    %v53 = vadd.s32 %v52, %v49
    %v54 = vadd.s32 %v52, %v50
    %vm55 = vcmp.lt.s32.totalorder %v53, 256
    %vm56 = vcmp.lt.s32.totalorder %v54, 256
    %vm57 = vcmp.gt.s32.totalorder %v46, 0
    %v58 = vsel %vm57, 1.0, 0.0
    %v60 = vlaneseq
    %v61 = vshrl.u32 %v60, 7
    %v62 = vsub.s32 0, %v61
    %v63 = vrot.slane %v58, %v62
    %v64 = vlaneseq
    %v65 = vshrl.u32 %v64, 7
    %v66 = vsub.s32 1, %v65
    %v67 = vrot.slane %v58, %v66
    %v70 = vmul.f32 %v32, %v63
    %v71 = vmul.f32 %v33, %v67
    %v72 = vmul.f32 %v34, %v63
    %v73 = vmul.f32 %v35, %v67
    %v74 = vmul.f32 %v36, %v63
    %v75 = vmul.f32 %v37, %v67
    %v76 = vmul.f32 %v38, %v63
    %v77 = vmul.f32 %v39, %v67
    %v78 = vmul.f32 %v40, %v63
    %v79 = vmul.f32 %v41, %v67
    %v80 = vmul.f32 %v42, %v63
    %v81 = vmul.f32 %v43, %v67
    %v82 = vmul.f32 %v44, %v63
    %v83 = vmul.f32 %v45, %v67
    %v84 = vsel %vm55, 1, 0
    %v85 = vsel %vm56, 1, 0
    %vm86 = vcmp.eq.s32.totalorder %v84, 1
    %vm87 = vcmp.eq.s32.totalorder %v85, 1
    %v88 = vsel %vm86, %v70, 0.0
    %v89 = vsel %vm87, %v71, 0.0
    %v90 = vsel %vm86, %v72, 0.0
    %v91 = vsel %vm87, %v73, 0.0
    %v92 = vsel %vm86, %v74, 0.0
    %v93 = vsel %vm87, %v75, 0.0
    %v94 = vsel %vm86, %v76, 0.0
    %v95 = vsel %vm87, %v77, 0.0
    %v96 = vsel %vm86, %v78, 0.0
    %v97 = vsel %vm87, %v79, 0.0
    %v98 = vsel %vm86, %v80, 0.0
    %v99 = vsel %vm87, %v81, 0.0
    %v100 = vsel %vm86, %v82, 0.0
    %v101 = vsel %vm87, %v83, 0.0
    %v102 = vmax.f32 %v88, %v92
    %v103 = vmax.f32 %v90, %v94
    %v104 = vmax.f32 %v102, %v96
    %v105 = vmax.f32 %v103, %v98
    %vm106 = vcmask 1040384
    %v107 = vsel %vm106, %v100, -inf
    %v108 = vmax.f32 %v104, %v107
    %v109 = vmax.f32 %v108, %v105
    %v110 = vrot.slane %v109, 4
    %v111 = vmax.f32 %v109, %v110
    %v112 = vrot.slane %v111, 2
    %v113 = vmax.f32 %v111, %v112
    %v114 = vrot.slane %v113, 1
    %v115 = vmax.f32 %v113, %v114
    %v116 = vmax.f32 %v89, %v93
    %v117 = vmax.f32 %v91, %v95
    %v118 = vmax.f32 %v116, %v97
    %v119 = vmax.f32 %v117, %v99
    %v120 = vsel %vm106, %v101, -inf
    %v121 = vmax.f32 %v118, %v120
    %v122 = vmax.f32 %v121, %v119
    %v123 = vrot.slane %v122, 4
    %v124 = vmax.f32 %v122, %v123
    %v125 = vrot.slane %v124, 2
    %v126 = vmax.f32 %v124, %v125
    %v127 = vrot.slane %v126, 1
    %v128 = vmax.f32 %v126, %v127
    %v129 = vsub.f32 %v88, %v115
    %v130 = vsub.f32 %v89, %v128
    %v131 = vsub.f32 %v90, %v115
    %v132 = vsub.f32 %v91, %v128
    %v133 = vsub.f32 %v92, %v115
    %v134 = vsub.f32 %v93, %v128
    %v135 = vsub.f32 %v94, %v115
    %v136 = vsub.f32 %v95, %v128
    %v137 = vsub.f32 %v96, %v115
    %v138 = vsub.f32 %v97, %v128
    %v139 = vsub.f32 %v98, %v115
    %v140 = vsub.f32 %v99, %v128
    %v141 = vsub.f32 %v100, %v115
    %v142 = vsub.f32 %v101, %v128
    %v143 = vmul.f32 %v129, 1.442695
    %v144 = vpow.pop %v143
    %v145 = vmul.f32 %v130, 1.442695
    %v146 = vpow.pop %v145
    %v147 = vmul.f32 %v131, 1.442695
    %v148 = vpow.pop %v147
    %v149 = vmul.f32 %v132, 1.442695
    %v150 = vpow.pop %v149
    %v151 = vmul.f32 %v133, 1.442695
    %v152 = vpow.pop %v151
    %v153 = vmul.f32 %v134, 1.442695
    %v154 = vpow.pop %v153
    %v155 = vmul.f32 %v135, 1.442695
    %v156 = vpow.pop %v155
    %v157 = vmul.f32 %v136, 1.442695
    %v158 = vpow.pop %v157
    %v159 = vmul.f32 %v137, 1.442695
    %v160 = vpow.pop %v159
    %v161 = vmul.f32 %v138, 1.442695
    %v162 = vpow.pop %v161
    %v163 = vmul.f32 %v139, 1.442695
    %v164 = vpow.pop %v163
    %v165 = vmul.f32 %v140, 1.442695
    %v166 = vpow.pop %v165
    %v167 = vmul.f32 %v141, 1.442695
    %v168 = vpow.pop %v167
    %v169 = vmul.f32 %v142, 1.442695
    %v170 = vpow.pop %v169
    %v171 = vadd.f32 %v144, %v148
    %v172 = vadd.f32 %v171, %v152
    %v173 = vadd.f32 %v172, %v156
    %v174 = vadd.f32 %v173, %v160
    %v175 = vadd.f32 %v174, %v164
    %v176 = vsel %vm106, %v168, 0.0
    %v177 = vadd.f32 %v175, %v176
    %v178 = vrot.slane %v177, 4
    %v179 = vadd.f32 %v177, %v178
    %v180 = vrot.slane %v179, 2
    %v181 = vadd.f32 %v179, %v180
    %v182 = vrot.slane %v181, 1
    %v183 = vadd.f32 %v181, %v182
    %v184 = vadd.f32 %v146, %v150
    %v185 = vadd.f32 %v184, %v154
    %v186 = vadd.f32 %v185, %v158
    %v187 = vadd.f32 %v186, %v162
    %v188 = vadd.f32 %v187, %v166
    %v189 = vsel %vm106, %v170, 0.0
    %v190 = vadd.f32 %v188, %v189
    %v191 = vrot.slane %v190, 4
    %v192 = vadd.f32 %v190, %v191
    %v193 = vrot.slane %v192, 2
    %v194 = vadd.f32 %v192, %v193
    %v195 = vrot.slane %v194, 1
    %v196 = vadd.f32 %v194, %v195
    %v197 = vlog2.pop %v183
    %v198 = vmul.f32 %v197, 0.6931472
    %v199 = vlog2.pop %v196
    %v200 = vmul.f32 %v199, 0.6931472
    %v201 = vadd.f32 %v115, %v198
    %v202 = vadd.f32 %v128, %v200
    %v203 = vlaneseq
    %v204 = vshrl.u32 %v203, 7
    %v205 = vadd.s32 %v204, 8
    %v206 = vadd.s32 %v204, 16
    %v207 = vadd.s32 %v204, 24
    %v208 = vadd.s32 %v204, 32
    %v209 = vadd.s32 %v204, 40
    %v210 = vadd.s32 %v204, 48
    %v211 = vlaneseq
    %v212 = vshrl.u32 %v211, 7
    %v213 = vsub.s32 0, %v212
    %v214 = vrot.slane %v47, %v213
    %v215 = vlaneseq
    %v216 = vshrl.u32 %v215, 7
    %v217 = vsub.s32 1, %v216
    %v218 = vrot.slane %v47, %v217
    %vm219 = vcmp.eq.s32.totalorder %v204, %v214
    %vm220 = vcmp.eq.s32.totalorder %v204, %v218
    %vm221 = vcmp.eq.s32.totalorder %v205, %v214
    %vm222 = vcmp.eq.s32.totalorder %v205, %v218
    %vm223 = vcmp.eq.s32.totalorder %v206, %v214
    %vm224 = vcmp.eq.s32.totalorder %v206, %v218
    %vm225 = vcmp.eq.s32.totalorder %v207, %v214
    %vm226 = vcmp.eq.s32.totalorder %v207, %v218
    %vm227 = vcmp.eq.s32.totalorder %v208, %v214
    %vm228 = vcmp.eq.s32.totalorder %v208, %v218
    %vm229 = vcmp.eq.s32.totalorder %v209, %v214
    %vm230 = vcmp.eq.s32.totalorder %v209, %v218
    %vm231 = vcmp.eq.s32.totalorder %v210, %v214
    %vm232 = vcmp.eq.s32.totalorder %v210, %v218
    %v233 = vsel %vm219, %v88, 0.0
    %v234 = vsel %vm220, %v89, 0.0
    %v235 = vsel %vm221, %v90, 0.0
    %v236 = vsel %vm222, %v91, 0.0
    %v237 = vsel %vm223, %v92, 0.0
    %v238 = vsel %vm224, %v93, 0.0
    %v239 = vsel %vm225, %v94, 0.0
    %v240 = vsel %vm226, %v95, 0.0
    %v241 = vsel %vm227, %v96, 0.0
    %v242 = vsel %vm228, %v97, 0.0
    %v243 = vsel %vm229, %v98, 0.0
    %v244 = vsel %vm230, %v99, 0.0
    %v245 = vsel %vm231, %v100, 0.0
    %v246 = vsel %vm232, %v101, 0.0
    %v247 = vadd.f32 %v233, %v235
    %v248 = vadd.f32 %v247, %v237
    %v249 = vadd.f32 %v248, %v239
    %v250 = vadd.f32 %v249, %v241
    %v251 = vadd.f32 %v250, %v243
    %v252 = vsel %vm106, %v245, 0.0
    %v253 = vadd.f32 %v251, %v252
    %v254 = vrot.slane %v253, 4
    %v255 = vadd.f32 %v253, %v254
    %v256 = vrot.slane %v255, 2
    %v257 = vadd.f32 %v255, %v256
    %v258 = vrot.slane %v257, 1
    %v259 = vadd.f32 %v257, %v258
    %v260 = vadd.f32 %v234, %v236
    %v261 = vadd.f32 %v260, %v238
    %v262 = vadd.f32 %v261, %v240
    %v263 = vadd.f32 %v262, %v242
    %v264 = vadd.f32 %v263, %v244
    %v265 = vsel %vm106, %v246, 0.0
    %v266 = vadd.f32 %v264, %v265
    %v267 = vrot.slane %v266, 4
    %v268 = vadd.f32 %v266, %v267
    %v269 = vrot.slane %v268, 2
    %v270 = vadd.f32 %v268, %v269
    %v271 = vrot.slane %v270, 1
    %v272 = vadd.f32 %v270, %v271
    %vm273 = vcmp.eq.s32.totalorder %v47, 0
    %v274 = vsel %vm273, 0.5, 1.0
    %v276 = vlaneseq
    %v277 = vshrl.u32 %v276, 7
    %v278 = vsub.s32 0, %v277
    %v279 = vrot.slane %v274, %v278
    %v280 = vlaneseq
    %v281 = vshrl.u32 %v280, 7
    %v282 = vsub.s32 1, %v281
    %v283 = vrot.slane %v274, %v282
    %v286 = vsel %vm55, %v279, 0.0
    %v287 = vsel %vm56, %v283, 0.0
    %v288 = vsub.f32 %v201, %v259
    %v289 = vsub.f32 %v202, %v272
    %v290 = vmul.f32 %v286, %v288
    %v291 = vmul.f32 %v287, %v289
    %v294 = vcombine.low %v290, %v291
    %v296 = vunpack.c.l.s4 1966171168
    %v297 = vunpack.c.0.s8 %v296
    %v298 = vlaneseq
    %v299 = vshrl.u32 %v298, 7
    %v300 = vsub.s32 %v297, %v299
    %v301 = vrot.slane %v294, %v300
    %v303 = vunpack.c.l.s4 1966171168
    %v304 = vunpack.c.0.s8 %v303
    %v305 = vlaneseq
    %v306 = vshrl.u32 %v305, 7
    %v307 = vsub.s32 %v304, %v306
    %v308 = vrot.slane %v301, %v307
    %v310 = vlaneseq
    %vm311 = vcmp.ge.s32.totalorder %v310, 0
    %vm312 = vcmp.lt.s32.totalorder %v310, 256
    %vm313 = vmand %vm311, %vm312
    %314 = vst.msk [vmem:[#allocation5] sm:$0x3] %vm313, %v308
    %v317 = vcombine.low %v286, %v287
    %v319 = vunpack.c.l.s4 1966171168
    %v320 = vunpack.c.0.s8 %v319
    %v321 = vlaneseq
    %v322 = vshrl.u32 %v321, 7
    %v323 = vsub.s32 %v320, %v322
    %v324 = vrot.slane %v317, %v323
    %v326 = vunpack.c.l.s4 1966171168
    %v327 = vunpack.c.0.s8 %v326
    %v328 = vlaneseq
    %v329 = vshrl.u32 %v328, 7
    %v330 = vsub.s32 %v327, %v329
    %v331 = vrot.slane %v324, %v330
    %333 = vst.msk [vmem:[#allocation6] sm:$0x3] %vm313, %v331
    // Predicated region
    $region18: #{tpu_custom_call.1} parent=1 // pred_check
      _
    $region19: #{tpu_custom_call.1} parent=1 // pred_check_branch
      %335 = sbr.rel (0) target = $region21
    $region20: #{tpu_custom_call.1} parent=1 // pred_region
      %s337 = ssub.s32 32, 32
      %338 = vsyncadd [#allocation4], %s337
      %s340 = sshll.u32 [#allocation5], 4
      %s341 = int_to_ptr.vmem [resolvable:$true] %s340
      %343 = dma.vmem_to_hbm [thread:$0]  %s341, 32, %s3, [#allocation4]
    $region21: #{tpu_custom_call.1} parent=1 // pred_fallthru
      _
    // Predicated region
    $region22: #{tpu_custom_call.1} parent=1 // pred_check
      _
    $region23: #{tpu_custom_call.1} parent=1 // pred_check_branch
      %345 = sbr.rel (0) target = $region25
    $region24: #{tpu_custom_call.1} parent=1 // pred_region
      %s347 = ssub.s32 32, 32
      %348 = vsyncadd [#allocation7], %s347
      %s350 = sshll.u32 [#allocation6], 4
      %s351 = int_to_ptr.vmem [resolvable:$true] %s350
      %353 = dma.vmem_to_hbm [thread:$0]  %s351, 32, %s4, [#allocation7]
    $region25: #{tpu_custom_call.1} parent=1 // pred_fallthru
      _
    // Predicated region
    $region26: #{tpu_custom_call.1} parent=1 // pred_check
      _
    $region27: #{tpu_custom_call.1} parent=1 // pred_check_branch
      %355 = sbr.rel (0) target = $region29
    $region28: #{tpu_custom_call.1} parent=1 // pred_region
      %356 = dma.done [#allocation4], 32
    $region29: #{tpu_custom_call.1} parent=1 // pred_fallthru
      _
    // Predicated region
    $region30: #{tpu_custom_call.1} parent=1 // pred_check
      _
    $region31: #{tpu_custom_call.1} parent=1 // pred_check_branch
      %358 = sbr.rel (0) target = $region33
    $region32: #{tpu_custom_call.1} parent=1 // pred_region
      %359 = dma.done [#allocation7], 32
    $region33: #{tpu_custom_call.1} parent=1 // pred_fallthru
      _
    %360 = vsyncpa [#allocation3], 1
    %361 = vsyncpa [#allocation4], 1
    %362 = vsyncpa [#allocation7], 1

</llo_original>
